<compile_context>
chip_gen: v6e
topology: v6e:2x2x1
jax: 0.10.0
libtpu: 0.0.40
codegen_flags: <defaults>
</compile_context>

<pallas_src>
import jax
import jax.numpy as jnp
from jax.flatten_util import ravel_pytree
from jax.experimental import pallas as pl
from jax.experimental.pallas import tpu as pltpu

# ------------------------- Adam hyperparameters (PyTorch defaults) -------------------------
LR = 1e-3
BETA1 = 0.9
BETA2 = 0.999
EPS = 1e-8

LANES = 128
SMALL_FALLBACK_ELEMS = 256 * 1024  # below this, fused XLA beats pallas_call launch overhead


def _round_up(x, m):
    return ((x + m - 1) // m) * m


def _device_max_block_r():
    """Largest tile row-count per TPU generation (sized against VMEM & HBM bandwidth)."""
    try:
        kind = jax.devices()[0].device_kind.lower()
    except Exception:
        return 1024
    if "7" in kind:      # v7x: 64 MiB physical VMEM, ~3.2 TB/s HBM -> big tiles amortize overhead
        return 4096
    if "v6" in kind:     # v6e: ~1.4 TB/s HBM, 32 MiB default scoped VMEM
        return 2048
    return 1024          # v5e / other: 16 MiB default scoped VMEM


def _choose_layout(total_elems):
    """Return (rows, block_r): rows multiple of block_r, block_r multiple of 8."""
    rows = _round_up(pl.cdiv(total_elems, LANES), 8)
    block_r = min(_device_max_block_r(), rows)
    block_r = max(8, (block_r // 8) * 8)
    # Prefer >= 2 grid tiles so the "parallel" axis can shard across both v7x TensorCores.
    if rows > 8 and rows // block_r < 2:
        block_r = max(8, _round_up(rows // 2, 8))
    rows = _round_up(rows, block_r)
    return rows, block_r


# ----------------------------------- Pallas Adam kernel ------------------------------------
def adam_kernel(hp_ref, p_ref, g_ref, m_ref, v_ref, p_out, m_out, v_out):
    """One Adam step for a (block_r, 128) tile of the flattened parameter slab.

    hp_ref (SMEM, f32[2]):
        hp_ref[0] = step_size    = lr / (1 - beta1**t)
        hp_ref[1] = inv_sqrt_bc2 = 1 / sqrt(1 - beta2**t)
    """
    g = g_ref[...]
    m_new = BETA1 * m_ref[...] + (1.0 - BETA1) * g
    v_new = BETA2 * v_ref[...] + (1.0 - BETA2) * (g * g)

    # PyTorch Adam: denom = sqrt(v)/sqrt(bc2) + eps ; p -= (lr/bc1) * m / denom
    denom = jnp.sqrt(v_new) * hp_ref[1] + EPS
    p_out[...] = p_ref[...] - hp_ref[0] * m_new / denom
    m_out[...] = m_new
    v_out[...] = v_new


def adam_step_pallas(p_slab, g_slab, m_slab, v_slab, hp, block_r):
    """p/g/m/v slabs: f32[R, 128].  hp: f32[2] scalars (SMEM)."""
    R, L = p_slab.shape
    assert L == LANES and R % block_r == 0 and block_r % 8 == 0

    tile = pl.BlockSpec((block_r, L), lambda i: (i, 0))
    smem = pl.BlockSpec(memory_space=pltpu.MemorySpace.SMEM)

    nbytes = R * L * 4
    cost = pl.CostEstimate(
        flops=10 * R * L,
        transcendentals=2 * R * L,      # sqrt + divide per element
        bytes_accessed=7 * nbytes,      # 4 slab reads + 3 slab writes
    )

    # 7 streamed slab operands x 2 pipeline buffers x tile bytes, plus headroom for
    # internal scratch.  Explicit so the same block_r works on v5e/v6e/v7x defaults.
    vmem_limit = 7 * 2 * block_r * L * 4 + (8 << 20)

    out_shape = [jax.ShapeDtypeStruct((R, L), jnp.float32)] * 3
    return pl.pallas_call(
        adam_kernel,
        grid=(R // block_r,),
        in_specs=[smem, tile, tile, tile, tile],
        out_specs=[tile, tile, tile],
        out_shape=out_shape,
        # in-place update: p -> p_new, m -> m_new, v -> v_new
        input_output_aliases={1: 0, 3: 1, 4: 2},
        compiler_params=pltpu.CompilerParams(
            dimension_semantics=("parallel",),
            vmem_limit_bytes=vmem_limit,
        ),
        cost_estimate=cost,
    )(hp, p_slab, g_slab, m_slab, v_slab)


def adam_step_xla(p, g, m, v, hp):
    """Fused-XLA fallback for tiny parameter counts (launch overhead dominates)."""
    m_new = BETA1 * m + (1.0 - BETA1) * g
    v_new = BETA2 * v + (1.0 - BETA2) * (g * g)
    denom = jnp.sqrt(v_new) * hp[1] + EPS
    return p - hp[0] * m_new / denom, m_new, v_new


def adam_step(p, g, m, v, hp, block_r, use_pallas=None):
    if use_pallas is None:
        use_pallas = p.size >= SMALL_FALLBACK_ELEMS
    if use_pallas:
        return adam_step_pallas(p, g, m, v, hp, block_r)
    return adam_step_xla(p, g, m, v, hp)


# --------------------------- persistent slab layout for the state --------------------------
def make_slab_layout(params):
    """Build once: converters between the param pytree and the [R, 128] f32 slab."""
    flat, unravel = ravel_pytree(params)
    total = int(flat.shape[0])
    rows, block_r = _choose_layout(total)
    padded = rows * LANES

    # NOTE: state is kept in f32 master copies (matches torch.optim.Adam on f32 params).
    def tree_to_slab(tree):
        v, _ = ravel_pytree(tree)
        v = v.astype(jnp.float32)
        return jnp.pad(v, (0, padded - total)).reshape(rows, LANES)

    def slab_to_tree(slab):
        return unravel(slab.reshape(-1)[:total])

    return tree_to_slab, slab_to_tree, rows, block_r


# ---------------------------- "Optimizer.forward(loss)" equivalent -------------------------
def make_optimizer_step(loss_fn, slab_to_tree, block_r, use_pallas=None):
    """Returns a jitted step: (p_slab, m_slab, v_slab, t, *loss_args) -> updated state.

    Semantics of the PyTorch module's forward(loss):
      zero_grad()      -> gradients are recomputed fresh (never accumulated)
      loss.backward()  -> jax.grad of the loss w.r.t. the parameter slab
      optimizer.step() -> Pallas Adam kernel, in-place on the slab state
    """
    def step(p_slab, m_slab, v_slab, t, *loss_args):
        # backward(): gradients computed directly in slab layout (pad region grads = 0).
        def slab_loss(slab):
            return loss_fn(slab_to_tree(slab), *loss_args)

        g_slab = jax.grad(slab_loss)(p_slab)

        t_new = t + 1
        tf = t_new.astype(jnp.float32)
        bc1 = 1.0 - BETA1 ** tf
        bc2 = 1.0 - BETA2 ** tf
        hp = jnp.stack([LR / bc1, 1.0 / jnp.sqrt(bc2)]).astype(jnp.float32)

        p_new, m_new, v_new = adam_step(
            p_slab, g_slab, m_slab, v_slab, hp, block_r, use_pallas)
        return p_new, m_new, v_new, t_new

    # donate the state slabs so the kernel's input_output_aliases are honored end-to-end
    return jax.jit(step, donate_argnums=(0, 1, 2))


# ---------------------------------------- reference ----------------------------------------
def adam_step_reference(params, grads, m_tree, v_tree, t_new):
    bc1 = 1.0 - BETA1 ** t_new
    bc2 = 1.0 - BETA2 ** t_new

    def upd(p, g, m, v):
        m_new = BETA1 * m + (1.0 - BETA1) * g
        v_new = BETA2 * v + (1.0 - BETA2) * g * g
        denom = jnp.sqrt(v_new) / jnp.sqrt(bc2) + EPS
        return p - (LR / bc1) * m_new / denom

    return jax.tree_util.tree_map(upd, params, grads, m_tree, v_tree)


# ------------------------------------------- main ------------------------------------------
if __name__ == "__main__":
    key = jax.random.PRNGKey(0)
    k_w, k_b, k_x, k_y = jax.random.split(key, 4)

    # Deterministic tiny "model": single linear layer, hidden=32, batch=2.
    hidden = 32
    batch = 2
    params = {
        "w": jax.random.normal(k_w, (hidden, hidden), dtype=jnp.float32) * 0.1,
        "b": jax.random.normal(k_b, (hidden,), dtype=jnp.float32) * 0.1,
    }
    x = jax.random.normal(k_x, (batch, hidden), dtype=jnp.float32)
    y = jax.random.normal(k_y, (batch, hidden), dtype=jnp.float32)

    def loss_fn(p, x, y):
        pred = x @ p["w"] + p["b"]
        return jnp.mean((pred - y) ** 2)

    # Pure-JAX reference (computed BEFORE the step, since the slabs are donated).
    grads_ref = jax.grad(loss_fn)(params, x, y)
    zeros = jax.tree_util.tree_map(jnp.zeros_like, params)
    ref_params = adam_step_reference(params, grads_ref, zeros, zeros, 1)

    # Build persistent slab-layout optimizer state (done once, not per step).
    tree_to_slab, slab_to_tree, rows, block_r = make_slab_layout(params)
    p_slab = tree_to_slab(params)
    m_slab = jnp.zeros_like(p_slab)   # exp_avg
    v_slab = jnp.zeros_like(p_slab)   # exp_avg_sq
    t = jnp.array(0, dtype=jnp.int32)

    # Force the Pallas path in the demo so the kernel is exercised; in production the
    # auto dispatch (use_pallas=None) falls back to fused XLA below ~256K elements.
    step_fn = make_optimizer_step(loss_fn, slab_to_tree, block_r, use_pallas=True)

    # One call of Optimizer.forward(loss): backward + Adam step (Pallas kernel).
    p_slab, m_slab, v_slab, t = step_fn(p_slab, m_slab, v_slab, t, x, y)
    (p_slab, m_slab, v_slab) = jax.block_until_ready((p_slab, m_slab, v_slab))

    new_params = slab_to_tree(p_slab)
    for name in ("w", "b"):
        assert jnp.allclose(new_params[name], ref_params[name], atol=1e-6, rtol=1e-5), name

    print("KERNEL_OK")
</pallas_src>

<mosaic_0001>
module attributes {stable_mosaic.version = 11 : i64} {
  func.func @adam_kernel(%arg0: i32, %arg1: memref<2xf32, #tpu.memory_space<smem>>, %arg2: memref<8x128xf32, #tpu.memory_space<vmem>>, %arg3: memref<8x128xf32, #tpu.memory_space<vmem>>, %arg4: memref<8x128xf32, #tpu.memory_space<vmem>>, %arg5: memref<8x128xf32, #tpu.memory_space<vmem>>, %arg6: memref<8x128xf32, #tpu.memory_space<vmem>>, %arg7: memref<8x128xf32, #tpu.memory_space<vmem>>, %arg8: memref<8x128xf32, #tpu.memory_space<vmem>>) attributes {dimension_semantics = [#tpu.dimension_semantics<parallel>], iteration_bounds = array<i64: 2>, scalar_prefetch = 0 : i64, scratch_operands = 0 : i64, tpu.core_type = #tpu.core_type<tc>, window_params = [{transform_indices = @transform_0, window_bounds = array<i64: 2>}, {transform_indices = @transform_1, window_bounds = array<i64: 8, 128>}, {transform_indices = @transform_2, window_bounds = array<i64: 8, 128>}, {transform_indices = @transform_3, window_bounds = array<i64: 8, 128>}, {transform_indices = @transform_4, window_bounds = array<i64: 8, 128>}, {transform_indices = @transform_5, window_bounds = array<i64: 8, 128>}, {transform_indices = @transform_6, window_bounds = array<i64: 8, 128>}, {transform_indices = @transform_7, window_bounds = array<i64: 8, 128>}]} {
    %c0 = arith.constant 0 : index
    %c0_0 = arith.constant 0 : index
    %0 = vector.load %arg3[%c0, %c0_0] : memref<8x128xf32, #tpu.memory_space<vmem>>, vector<8x128xf32>
    %c0_1 = arith.constant 0 : index
    %c0_2 = arith.constant 0 : index
    %1 = vector.load %arg4[%c0_1, %c0_2] : memref<8x128xf32, #tpu.memory_space<vmem>>, vector<8x128xf32>
    %cst = arith.constant 0.899999976 : f32
    %2 = vector.broadcast %cst : f32 to vector<8x128xf32>
    %3 = arith.mulf %2, %1 : vector<8x128xf32>
    %cst_3 = arith.constant 1.000000e-01 : f32
    %4 = vector.broadcast %cst_3 : f32 to vector<8x128xf32>
    %5 = arith.mulf %4, %0 : vector<8x128xf32>
    %6 = arith.addf %3, %5 : vector<8x128xf32>
    %c0_4 = arith.constant 0 : index
    %c0_5 = arith.constant 0 : index
    %7 = vector.load %arg5[%c0_4, %c0_5] : memref<8x128xf32, #tpu.memory_space<vmem>>, vector<8x128xf32>
    %cst_6 = arith.constant 9.990000e-01 : f32
    %8 = vector.broadcast %cst_6 : f32 to vector<8x128xf32>
    %9 = arith.mulf %8, %7 : vector<8x128xf32>
    %10 = arith.mulf %0, %0 : vector<8x128xf32>
    %cst_7 = arith.constant 1.000000e-03 : f32
    %11 = vector.broadcast %cst_7 : f32 to vector<8x128xf32>
    %12 = arith.mulf %11, %10 : vector<8x128xf32>
    %13 = arith.addf %9, %12 : vector<8x128xf32>
    %14 = math.sqrt %13 : vector<8x128xf32>
    %c1 = arith.constant 1 : index
    %15 = memref.load %arg1[%c1] : memref<2xf32, #tpu.memory_space<smem>>
    %16 = vector.broadcast %15 : f32 to vector<8x128xf32>
    %17 = arith.mulf %14, %16 : vector<8x128xf32>
    %cst_8 = arith.constant 9.99999993E-9 : f32
    %18 = vector.broadcast %cst_8 : f32 to vector<8x128xf32>
    %19 = arith.addf %17, %18 : vector<8x128xf32>
    %c0_9 = arith.constant 0 : index
    %c0_10 = arith.constant 0 : index
    %20 = vector.load %arg2[%c0_9, %c0_10] : memref<8x128xf32, #tpu.memory_space<vmem>>, vector<8x128xf32>
    %c0_11 = arith.constant 0 : index
    %21 = memref.load %arg1[%c0_11] : memref<2xf32, #tpu.memory_space<smem>>
    %22 = vector.broadcast %21 : f32 to vector<8x128xf32>
    %23 = arith.mulf %22, %6 : vector<8x128xf32>
    %24 = arith.divf %23, %19 : vector<8x128xf32>
    %25 = arith.subf %20, %24 : vector<8x128xf32>
    %c0_12 = arith.constant 0 : index
    %c0_13 = arith.constant 0 : index
    %26 = vector.load %arg6[%c0_12, %c0_13] : memref<8x128xf32, #tpu.memory_space<vmem>>, vector<8x128xf32>
    tpu.vector_store %arg6[%c0_12, %c0_13], %25 {strides = array<i32>} : memref<8x128xf32, #tpu.memory_space<vmem>>, vector<8x128xf32>,
    %c0_14 = arith.constant 0 : index
    %c0_15 = arith.constant 0 : index
    %27 = vector.load %arg7[%c0_14, %c0_15] : memref<8x128xf32, #tpu.memory_space<vmem>>, vector<8x128xf32>
    tpu.vector_store %arg7[%c0_14, %c0_15], %6 {strides = array<i32>} : memref<8x128xf32, #tpu.memory_space<vmem>>, vector<8x128xf32>,
    %c0_16 = arith.constant 0 : index
    %c0_17 = arith.constant 0 : index
    %28 = vector.load %arg8[%c0_16, %c0_17] : memref<8x128xf32, #tpu.memory_space<vmem>>, vector<8x128xf32>
    tpu.vector_store %arg8[%c0_16, %c0_17], %13 {strides = array<i32>} : memref<8x128xf32, #tpu.memory_space<vmem>>, vector<8x128xf32>,
    return
  }
  func.func @transform_0(%arg0: i32) -> i32 {
    %c0_i32 = arith.constant 0 : i32
    %c0_i32_0 = arith.constant 0 : i32
    return %c0_i32 : i32
  }
  func.func @transform_1(%arg0: i32) -> (i32, i32) {
    %c0_i32 = arith.constant 0 : i32
    %c0_i32_0 = arith.constant 0 : i32
    return %arg0, %c0_i32 : i32, i32
  }
  func.func @transform_2(%arg0: i32) -> (i32, i32) {
    %c0_i32 = arith.constant 0 : i32
    %c0_i32_0 = arith.constant 0 : i32
    return %arg0, %c0_i32 : i32, i32
  }
  func.func @transform_3(%arg0: i32) -> (i32, i32) {
    %c0_i32 = arith.constant 0 : i32
    %c0_i32_0 = arith.constant 0 : i32
    return %arg0, %c0_i32 : i32, i32
  }
  func.func @transform_4(%arg0: i32) -> (i32, i32) {
    %c0_i32 = arith.constant 0 : i32
    %c0_i32_0 = arith.constant 0 : i32
    return %arg0, %c0_i32 : i32, i32
  }
  func.func @transform_5(%arg0: i32) -> (i32, i32) {
    %c0_i32 = arith.constant 0 : i32
    %c0_i32_0 = arith.constant 0 : i32
    return %arg0, %c0_i32 : i32, i32
  }
  func.func @transform_6(%arg0: i32) -> (i32, i32) {
    %c0_i32 = arith.constant 0 : i32
    %c0_i32_0 = arith.constant 0 : i32
    return %arg0, %c0_i32 : i32, i32
  }
  func.func @transform_7(%arg0: i32) -> (i32, i32) {
    %c0_i32 = arith.constant 0 : i32
    %c0_i32_0 = arith.constant 0 : i32
    return %arg0, %c0_i32 : i32, i32
  }
}

</mosaic_0001>

<llo_original>
// kernel: step.1
$region0: #{step.1}
  #allocation0 [shape = 'u32[]', space=smem, size = 0x4, offset = 0x4, fixed_abs, tag = 'smem constant byte address 0x4 - core index']
  #allocation1 [shape = 'u32[144,128]{1,0:T(1,128)}', space=vmem, size = 0x12000, scoped, tag = 'internal scratch']
  %s0 = inlined_call_operand.vmem [shape: f32[2], index: 0, kind: input, shape index: {}]
  %s1 = inlined_call_operand.vmem [shape: f32[16,128], index: 1, kind: input, shape index: {}, may-alias: {1,5}]
  %s2 = inlined_call_operand.vmem [shape: f32[16,128], index: 2, kind: input, shape index: {}]
  %s3 = inlined_call_operand.vmem [shape: f32[16,128], index: 3, kind: input, shape index: {}, may-alias: {3,6}]
  %s4 = inlined_call_operand.vmem [shape: f32[16,128], index: 4, kind: input, shape index: {}, may-alias: {4,7}]
  %s5 = inlined_call_operand.vmem [shape: f32[16,128], index: 5, kind: output, shape index: {0}, may-alias: {1,5}]
  %s6 = inlined_call_operand.vmem [shape: f32[16,128], index: 6, kind: output, shape index: {1}, may-alias: {3,6}]
  %s7 = inlined_call_operand.vmem [shape: f32[16,128], index: 7, kind: output, shape index: {2}, may-alias: {4,7}]
  %8 = xla_tuple %s5, %s6, %s7
  %s9 = sld [smem:[#allocation0]]
  $region73: #{step.1} parent=0
    _
  %s11 = ssub.s32 1, %s9
  %s12 = scalar_select 0, %s11, %s9
  $region1: #{step.1} parent=0
    #allocation2 [shape = 'u8[512]{0}', space=smem, size = 0x200, scoped, tag = 'input window, operand 0, single buffered']
    #allocation3 [shape = 's32[2]{0}', space=sflag, size = 0x8, scoped, tag = 'scoped memory for step.1']
    %13 = vsyncpa [#allocation3], 0
    loop: start=0, step=1, limit=4
    $region2: #{step.1} parent=1 // loop_pre_header
      _
    $region3: #{step.1} parent=1 // loop_header
      %s15 = sphi 0, %s19
      %p16 = scmp.ge.s32.totalorder %s15, 4
      %s23 = sphi 0, %s23
      %s25 = sphi 0, %s23
      %s26 = sphi 0, %s25
      %s40 = sphi 0, %s26
      %s46 = sphi 0, %s48
      %s49 = sphi 0, %s46
      %s50 = sphi 0, %s49
      %s66 = sphi 0, %s50
      %s72 = sphi 0, %s74
      %s75 = sphi 0, %s72
      %s76 = sphi 0, %s75
      %s92 = sphi 0, %s76
      %s98 = sphi 0, %s100
      %s101 = sphi 0, %s98
      %s102 = sphi 0, %s101
      %s118 = sphi 0, %s102
      %s124 = sphi 0, %s126
      %s127 = sphi 0, %s124
      %s128 = sphi 0, %s127
      %s144 = sphi 0, %s128
      %s150 = sphi 0, %s152
      %s153 = sphi 0, %s150
      %s154 = sphi 0, %s153
      %s170 = sphi 0, %s154
      %s176 = sphi 0, %s178
      %s179 = sphi 0, %s176
      %s180 = sphi 0, %s179
      %s196 = sphi 0, %s180
      %s202 = sphi 0, %s204
      %s205 = sphi 0, %s202
      %s206 = sphi 0, %s205
      %s222 = sphi 0, %s206
    $region4: #{step.1} parent=1 // loop_header_branch
      %18 = sbr.rel (%p16) target = $region8
    $region5: #{step.1} parent=1 // loop_body
      %s20 = ssub.s32 %s15, 1
      %s21 = ssub.s32 %s15, 2
      %s22 = sadd.s32 %s15, 1
      %s24 = sadd.s32 %s23, 1
      %p27 = scmp.eq.s32.totalorder %s15, 1
      %p28 = scmp.ne.s32.totalorder %s23, %s25
      %p29 = scmp.eq.s32.totalorder %s15, 0
      %p30 = por %p28, %p29
      %p31 = scmp.ne.s32.totalorder %s23, %s25
      %p32 = scmp.eq.s32.totalorder %s20, 1
      %p33 = por %p31, %p32
      %p34 = scmp.ne.s32.totalorder %s25, %s26
      %p35 = scmp.eq.s32.totalorder %s20, 0
      %p36 = por %p34, %p35
      %p37 = scmp.ne.s32.totalorder %s25, %s26
      %p38 = scmp.eq.s32.totalorder %s21, 1
      %p39 = por %p37, %p38
      %p41 = scmp.ne.s32.totalorder %s26, %s40
      %p42 = scmp.eq.s32.totalorder %s21, 0
      %p43 = por %p41, %p42
      %s44 = ssub.s32 %s15, %s22
      %p45 = scmp.eq.s32.totalorder %s44, 0
      %s47 = sadd.s32 %s46, 1
      %s48 = scalar_select %p45, %s46, %s47
      %p51 = pneg %p45
      %p52 = scmp.eq.s32.totalorder %s15, 1
      %p53 = por %p51, %p52
      %p54 = scmp.ne.s32.totalorder %s46, %s49
      %p55 = scmp.eq.s32.totalorder %s15, 0
      %p56 = por %p54, %p55
      %p57 = scmp.ne.s32.totalorder %s46, %s49
      %p58 = scmp.eq.s32.totalorder %s20, 1
      %p59 = por %p57, %p58
      %p60 = scmp.ne.s32.totalorder %s49, %s50
      %p61 = scmp.eq.s32.totalorder %s20, 0
      %p62 = por %p60, %p61
      %p63 = scmp.ne.s32.totalorder %s49, %s50
      %p64 = scmp.eq.s32.totalorder %s21, 1
      %p65 = por %p63, %p64
      %p67 = scmp.ne.s32.totalorder %s50, %s66
      %p68 = scmp.eq.s32.totalorder %s21, 0
      %p69 = por %p67, %p68
      %s70 = ssub.s32 %s15, %s22
      %p71 = scmp.eq.s32.totalorder %s70, 0
      %s73 = sadd.s32 %s72, 1
      %s74 = scalar_select %p71, %s72, %s73
      %p77 = pneg %p71
      %p78 = scmp.eq.s32.totalorder %s15, 1
      %p79 = por %p77, %p78
      %p80 = scmp.ne.s32.totalorder %s72, %s75
      %p81 = scmp.eq.s32.totalorder %s15, 0
      %p82 = por %p80, %p81
      %p83 = scmp.ne.s32.totalorder %s72, %s75
      %p84 = scmp.eq.s32.totalorder %s20, 1
      %p85 = por %p83, %p84
      %p86 = scmp.ne.s32.totalorder %s75, %s76
      %p87 = scmp.eq.s32.totalorder %s20, 0
      %p88 = por %p86, %p87
      %p89 = scmp.ne.s32.totalorder %s75, %s76
      %p90 = scmp.eq.s32.totalorder %s21, 1
      %p91 = por %p89, %p90
      %p93 = scmp.ne.s32.totalorder %s76, %s92
      %p94 = scmp.eq.s32.totalorder %s21, 0
      %p95 = por %p93, %p94
      %s96 = ssub.s32 %s15, %s22
      %p97 = scmp.eq.s32.totalorder %s96, 0
      %s99 = sadd.s32 %s98, 1
      %s100 = scalar_select %p97, %s98, %s99
      %p103 = pneg %p97
      %p104 = scmp.eq.s32.totalorder %s15, 1
      %p105 = por %p103, %p104
      %p106 = scmp.ne.s32.totalorder %s98, %s101
      %p107 = scmp.eq.s32.totalorder %s15, 0
      %p108 = por %p106, %p107
      %p109 = scmp.ne.s32.totalorder %s98, %s101
      %p110 = scmp.eq.s32.totalorder %s20, 1
      %p111 = por %p109, %p110
      %p112 = scmp.ne.s32.totalorder %s101, %s102
      %p113 = scmp.eq.s32.totalorder %s20, 0
      %p114 = por %p112, %p113
      %p115 = scmp.ne.s32.totalorder %s101, %s102
      %p116 = scmp.eq.s32.totalorder %s21, 1
      %p117 = por %p115, %p116
      %p119 = scmp.ne.s32.totalorder %s102, %s118
      %p120 = scmp.eq.s32.totalorder %s21, 0
      %p121 = por %p119, %p120
      %s122 = ssub.s32 %s15, %s22
      %p123 = scmp.eq.s32.totalorder %s122, 0
      %s125 = sadd.s32 %s124, 1
      %s126 = scalar_select %p123, %s124, %s125
      %p129 = pneg %p123
      %p130 = scmp.eq.s32.totalorder %s15, 1
      %p131 = por %p129, %p130
      %p132 = scmp.ne.s32.totalorder %s124, %s127
      %p133 = scmp.eq.s32.totalorder %s15, 0
      %p134 = por %p132, %p133
      %p135 = scmp.ne.s32.totalorder %s124, %s127
      %p136 = scmp.eq.s32.totalorder %s20, 1
      %p137 = por %p135, %p136
      %p138 = scmp.ne.s32.totalorder %s127, %s128
      %p139 = scmp.eq.s32.totalorder %s20, 0
      %p140 = por %p138, %p139
      %p141 = scmp.ne.s32.totalorder %s127, %s128
      %p142 = scmp.eq.s32.totalorder %s21, 1
      %p143 = por %p141, %p142
      %p145 = scmp.ne.s32.totalorder %s128, %s144
      %p146 = scmp.eq.s32.totalorder %s21, 0
      %p147 = por %p145, %p146
      %s148 = ssub.s32 %s15, %s22
      %p149 = scmp.eq.s32.totalorder %s148, 0
      %s151 = sadd.s32 %s150, 1
      %s152 = scalar_select %p149, %s150, %s151
      %p155 = pneg %p149
      %p156 = scmp.eq.s32.totalorder %s15, 1
      %p157 = por %p155, %p156
      %p158 = scmp.ne.s32.totalorder %s150, %s153
      %p159 = scmp.eq.s32.totalorder %s15, 0
      %p160 = por %p158, %p159
      %p161 = scmp.ne.s32.totalorder %s150, %s153
      %p162 = scmp.eq.s32.totalorder %s20, 1
      %p163 = por %p161, %p162
      %p164 = scmp.ne.s32.totalorder %s153, %s154
      %p165 = scmp.eq.s32.totalorder %s20, 0
      %p166 = por %p164, %p165
      %p167 = scmp.ne.s32.totalorder %s153, %s154
      %p168 = scmp.eq.s32.totalorder %s21, 1
      %p169 = por %p167, %p168
      %p171 = scmp.ne.s32.totalorder %s154, %s170
      %p172 = scmp.eq.s32.totalorder %s21, 0
      %p173 = por %p171, %p172
      %s174 = ssub.s32 %s15, %s22
      %p175 = scmp.eq.s32.totalorder %s174, 0
      %s177 = sadd.s32 %s176, 1
      %s178 = scalar_select %p175, %s176, %s177
      %p181 = pneg %p175
      %p182 = scmp.eq.s32.totalorder %s15, 1
      %p183 = por %p181, %p182
      %p184 = scmp.ne.s32.totalorder %s176, %s179
      %p185 = scmp.eq.s32.totalorder %s15, 0
      %p186 = por %p184, %p185
      %p187 = scmp.ne.s32.totalorder %s176, %s179
      %p188 = scmp.eq.s32.totalorder %s20, 1
      %p189 = por %p187, %p188
      %p190 = scmp.ne.s32.totalorder %s179, %s180
      %p191 = scmp.eq.s32.totalorder %s20, 0
      %p192 = por %p190, %p191
      %p193 = scmp.ne.s32.totalorder %s179, %s180
      %p194 = scmp.eq.s32.totalorder %s21, 1
      %p195 = por %p193, %p194
      %p197 = scmp.ne.s32.totalorder %s180, %s196
      %p198 = scmp.eq.s32.totalorder %s21, 0
      %p199 = por %p197, %p198
      %s200 = ssub.s32 %s15, %s22
      %p201 = scmp.eq.s32.totalorder %s200, 0
      %s203 = sadd.s32 %s202, 1
      %s204 = scalar_select %p201, %s202, %s203
      %p207 = pneg %p201
      %p208 = scmp.eq.s32.totalorder %s15, 1
      %p209 = por %p207, %p208
      %p210 = scmp.ne.s32.totalorder %s202, %s205
      %p211 = scmp.eq.s32.totalorder %s15, 0
      %p212 = por %p210, %p211
      %p213 = scmp.ne.s32.totalorder %s202, %s205
      %p214 = scmp.eq.s32.totalorder %s20, 1
      %p215 = por %p213, %p214
      %p216 = scmp.ne.s32.totalorder %s205, %s206
      %p217 = scmp.eq.s32.totalorder %s20, 0
      %p218 = por %p216, %p217
      %p219 = scmp.ne.s32.totalorder %s205, %s206
      %p220 = scmp.eq.s32.totalorder %s21, 1
      %p221 = por %p219, %p220
      %p223 = scmp.ne.s32.totalorder %s206, %s222
      %p224 = scmp.eq.s32.totalorder %s21, 0
      %p225 = por %p223, %p224
      %p226 = scmp.le.s32.totalorder 1, %s15
      %p227 = scmp.lt.s32.totalorder %s15, 3
      %p228 = pnand %p226, %p227
      %p229 = pneg %p228
      // Predicated region
      $region9: #{step.1} parent=5 // pred_check
        _
      $region10: #{step.1} parent=5 // pred_check_branch
        %231 = sbr.rel (%p228) target = $region12
      $region11: #{step.1} parent=5 // pred_region
        %s232 = ssub.s32 %s15, 1
        // Predicated region
        $region13: #{step.1} parent=11 // pred_check
          %p233 = pneg %p36
        $region14: #{step.1} parent=11 // pred_check_branch
          %235 = sbr.rel (%p233) target = $region16
        $region15: #{step.1} parent=11 // pred_region
          %s237 = ssub.s32 16, 16
          %238 = vsyncadd [#allocation3], %s237
          %s240 = sshll.u32 %s0, 4
          %s241 = int_to_ptr.vmem [resolvable:$true] %s240
          %243 = dma.vmem_to_smem %s241, 16, [#allocation2], [#allocation3]
        $region16: #{step.1} parent=11 // pred_fallthru
          _
      $region12: #{step.1} parent=5 // pred_fallthru
        _
      %p244 = scmp.lt.s32.totalorder %s15, 2
      // Predicated region
      $region17: #{step.1} parent=5 // pred_check
        %p245 = pneg %p244
      $region18: #{step.1} parent=5 // pred_check_branch
        %247 = sbr.rel (%p245) target = $region20
      $region19: #{step.1} parent=5 // pred_region
        // Predicated region
        $region21: #{step.1} parent=19 // pred_check
          %p248 = pneg %p56
        $region22: #{step.1} parent=19 // pred_check_branch
          %250 = sbr.rel (%p248) target = $region24
        $region23: #{step.1} parent=19 // pred_region
          %p251 = scmp.lt.s32.totalorder %s15, 1
          %s252 = scalar_select %p251, %s15, 1
          %s253 = smul.addr %s252, 8
          %s254 = scalar_lea.vmem %s1, %s253
        $region24: #{step.1} parent=19 // pred_fallthru
          _
        // Predicated region
        $region25: #{step.1} parent=19 // pred_check
          %p255 = pneg %p82
        $region26: #{step.1} parent=19 // pred_check_branch
          %257 = sbr.rel (%p255) target = $region28
        $region27: #{step.1} parent=19 // pred_region
          %p258 = scmp.lt.s32.totalorder %s15, 1
          %s259 = scalar_select %p258, %s15, 1
          %s260 = smul.addr %s259, 8
          %s261 = scalar_lea.vmem %s2, %s260
        $region28: #{step.1} parent=19 // pred_fallthru
          _
        // Predicated region
        $region29: #{step.1} parent=19 // pred_check
          %p262 = pneg %p108
        $region30: #{step.1} parent=19 // pred_check_branch
          %264 = sbr.rel (%p262) target = $region32
        $region31: #{step.1} parent=19 // pred_region
          %p265 = scmp.lt.s32.totalorder %s15, 1
          %s266 = scalar_select %p265, %s15, 1
          %s267 = smul.addr %s266, 8
          %s268 = scalar_lea.vmem %s3, %s267
        $region32: #{step.1} parent=19 // pred_fallthru
          _
        // Predicated region
        $region33: #{step.1} parent=19 // pred_check
          %p269 = pneg %p134
        $region34: #{step.1} parent=19 // pred_check_branch
          %271 = sbr.rel (%p269) target = $region36
        $region35: #{step.1} parent=19 // pred_region
          %p272 = scmp.lt.s32.totalorder %s15, 1
          %s273 = scalar_select %p272, %s15, 1
          %s274 = smul.addr %s273, 8
          %s275 = scalar_lea.vmem %s4, %s274
        $region36: #{step.1} parent=19 // pred_fallthru
          _
      $region20: #{step.1} parent=5 // pred_fallthru
        _
      %p276 = scmp.le.s32.totalorder 1, %s15
      %p277 = scmp.lt.s32.totalorder %s15, 3
      %p278 = pnand %p276, %p277
      %p279 = pneg %p278
      // Predicated region
      $region37: #{step.1} parent=5 // pred_check
        _
      $region38: #{step.1} parent=5 // pred_check_branch
        %281 = sbr.rel (%p278) target = $region40
      $region39: #{step.1} parent=5 // pred_region
        %s282 = ssub.s32 %s15, 1
        // Predicated region
        $region41: #{step.1} parent=39 // pred_check
          %p283 = pneg %p36
        $region42: #{step.1} parent=39 // pred_check_branch
          %285 = sbr.rel (%p283) target = $region44
        $region43: #{step.1} parent=39 // pred_region
          %286 = dma.done [#allocation3], 16
        $region44: #{step.1} parent=39 // pred_fallthru
          _
        %287 = sfence
        %p288 = pneg %p36
        %p289 = pneg %p33
        %p290 = scmp.lt.s32.totalorder %s20, 1
        %s291 = scalar_select %p290, %s20, 1
        %s292 = smul.addr %s291, 8
        %s293 = scalar_lea.vmem %s1, %s292
        %p294 = pneg %p62
        %p295 = pneg %p59
        %p296 = scmp.lt.s32.totalorder %s20, 1
        %s297 = scalar_select %p296, %s20, 1
        %s298 = smul.addr %s297, 8
        %s299 = scalar_lea.vmem %s2, %s298
        %p300 = pneg %p88
        %p301 = pneg %p85
        %p302 = scmp.lt.s32.totalorder %s20, 1
        %s303 = scalar_select %p302, %s20, 1
        %s304 = smul.addr %s303, 8
        %s305 = scalar_lea.vmem %s3, %s304
        %p306 = pneg %p114
        %p307 = pneg %p111
        %p308 = scmp.lt.s32.totalorder %s20, 1
        %s309 = scalar_select %p308, %s20, 1
        %s310 = smul.addr %s309, 8
        %s311 = scalar_lea.vmem %s4, %s310
        %p312 = pneg %p140
        %p313 = pneg %p137
        %p314 = pneg %p166
        %p315 = pneg %p163
        %p316 = scmp.lt.s32.totalorder %s20, 1
        %s317 = scalar_select %p316, %s20, 1
        %s318 = smul.addr %s317, 8
        %s319 = scalar_lea.vmem %s5, %s318
        %p320 = pneg %p192
        %p321 = pneg %p189
        %p322 = scmp.lt.s32.totalorder %s20, 1
        %s323 = scalar_select %p322, %s20, 1
        %s324 = smul.addr %s323, 8
        %s325 = scalar_lea.vmem %s6, %s324
        %p326 = pneg %p218
        %p327 = pneg %p215
        %p328 = scmp.lt.s32.totalorder %s20, 1
        %s329 = scalar_select %p328, %s20, 1
        %s330 = smul.addr %s329, 8
        %s331 = scalar_lea.vmem %s7, %s330
        %p332 = scmp.lt.s32.totalorder %s20, 1
        %s333 = scalar_select %p332, %s20, 1
        %s334 = smul.addr %s333, 8
        %s335 = scalar_lea.vmem %s1, %s334
        %p336 = scmp.lt.s32.totalorder %s20, 1
        %s337 = scalar_select %p336, %s20, 1
        %s338 = smul.addr %s337, 8
        %s339 = scalar_lea.vmem %s2, %s338
        %p340 = scmp.lt.s32.totalorder %s20, 1
        %s341 = scalar_select %p340, %s20, 1
        %s342 = smul.addr %s341, 8
        %s343 = scalar_lea.vmem %s3, %s342
        %p344 = scmp.lt.s32.totalorder %s20, 1
        %s345 = scalar_select %p344, %s20, 1
        %s346 = smul.addr %s345, 8
        %s347 = scalar_lea.vmem %s4, %s346
        %p348 = scmp.lt.s32.totalorder %s20, 1
        %s349 = scalar_select %p348, %s20, 1
        %s350 = smul.addr %s349, 8
        %s351 = scalar_lea.vmem %s5, %s350
        %p352 = scmp.lt.s32.totalorder %s20, 1
        %s353 = scalar_select %p352, %s20, 1
        %s354 = smul.addr %s353, 8
        %s355 = scalar_lea.vmem %s6, %s354
        %p356 = scmp.lt.s32.totalorder %s20, 1
        %s357 = scalar_select %p356, %s20, 1
        %s358 = smul.addr %s357, 8
        %s359 = scalar_lea.vmem %s7, %s358
        %v360 = vld [vmem:[%s339] sm:$0xff]
        %v361 = vld [vmem:[%s343] sm:$0xff]
        %v362 = vmul.f32 %v361, 0.9
        %v363 = vmul.f32 %v360, 0.1
        %v364 = vadd.f32 %v362, %v363
        %v365 = vld [vmem:[%s347] sm:$0xff]
        %v366 = vmul.f32 %v365, 0.999
        %v367 = vmul.f32 %v360, %v360
        %v368 = vmul.f32 %v367, 0.001
        %v369 = vadd.f32 %v366, %v368
        %v370 = vrsqrt.pop %v369
        %v371 = vmul.f32 %v369, %v370
        %vm372 = vcmp.eq.f32.partialorder %v369, inf
        %v373 = vsel %vm372, %v369, %v371
        %vm374 = vcmp.eq.f32.partialorder %v369, 0.0
        %v375 = vand.u32 %v369, 2147483648
        %v376 = vsel %vm374, %v375, %v373
        %s377 = sld [smem:[#allocation2 + $0x1]]
        %v378 = vstv %s377
        %v379 = vmul.f32 %v376, %v378
        %v380 = vadd.f32 %v379, 1e-08
        %v381 = vld [vmem:[%s335] sm:$0xff]
        %s382 = sld [smem:[#allocation2]]
        %v383 = vstv %s382
        %v384 = vmul.f32 %v383, %v364
        %v385 = vrcp.pop %v380
        %v386 = vmul.f32 %v384, %v385
        %v387 = vsub.f32 %v381, %v386
        %388 = vst [vmem:[%s351] sm:$0xff] %v387
        %389 = vst [vmem:[%s355] sm:$0xff] %v364
        %390 = vst [vmem:[%s359] sm:$0xff] %v369
        %p391 = scmp.lt.s32.totalorder %s20, 1
        %s392 = scalar_select %p391, %s20, 1
        %s393 = smul.addr %s392, 8
        %s394 = scalar_lea.vmem %s5, %s393
        %p395 = scmp.lt.s32.totalorder %s20, 1
        %s396 = scalar_select %p395, %s20, 1
        %s397 = smul.addr %s396, 8
        %s398 = scalar_lea.vmem %s6, %s397
        %p399 = scmp.lt.s32.totalorder %s20, 1
        %s400 = scalar_select %p399, %s20, 1
        %s401 = smul.addr %s400, 8
        %s402 = scalar_lea.vmem %s7, %s401
        // Predicated region
        $region45: #{step.1} parent=39 // pred_check
          %p403 = pneg %p163
        $region46: #{step.1} parent=39 // pred_check_branch
          %405 = sbr.rel (%p403) target = $region48
        $region47: #{step.1} parent=39 // pred_region
          _
        $region48: #{step.1} parent=39 // pred_fallthru
          _
        // Predicated region
        $region49: #{step.1} parent=39 // pred_check
          %p406 = pneg %p189
        $region50: #{step.1} parent=39 // pred_check_branch
          %408 = sbr.rel (%p406) target = $region52
        $region51: #{step.1} parent=39 // pred_region
          _
        $region52: #{step.1} parent=39 // pred_fallthru
          _
        // Predicated region
        $region53: #{step.1} parent=39 // pred_check
          %p409 = pneg %p215
        $region54: #{step.1} parent=39 // pred_check_branch
          %411 = sbr.rel (%p409) target = $region56
        $region55: #{step.1} parent=39 // pred_region
          _
        $region56: #{step.1} parent=39 // pred_fallthru
          _
      $region40: #{step.1} parent=5 // pred_fallthru
        _
      %p412 = scmp.le.s32.totalorder 2, %s15
      // Predicated region
      $region57: #{step.1} parent=5 // pred_check
        %p413 = pneg %p412
      $region58: #{step.1} parent=5 // pred_check_branch
        %415 = sbr.rel (%p413) target = $region60
      $region59: #{step.1} parent=5 // pred_region
        %s416 = ssub.s32 %s15, 2
        // Predicated region
        $region61: #{step.1} parent=59 // pred_check
          %p417 = pneg %p169
        $region62: #{step.1} parent=59 // pred_check_branch
          %419 = sbr.rel (%p417) target = $region64
        $region63: #{step.1} parent=59 // pred_region
          %p420 = scmp.lt.s32.totalorder %s21, 1
          %s421 = scalar_select %p420, %s21, 1
          %s422 = smul.addr %s421, 8
          %s423 = scalar_lea.vmem %s5, %s422
        $region64: #{step.1} parent=59 // pred_fallthru
          _
        // Predicated region
        $region65: #{step.1} parent=59 // pred_check
          %p424 = pneg %p195
        $region66: #{step.1} parent=59 // pred_check_branch
          %426 = sbr.rel (%p424) target = $region68
        $region67: #{step.1} parent=59 // pred_region
          %p427 = scmp.lt.s32.totalorder %s21, 1
          %s428 = scalar_select %p427, %s21, 1
          %s429 = smul.addr %s428, 8
          %s430 = scalar_lea.vmem %s6, %s429
        $region68: #{step.1} parent=59 // pred_fallthru
          _
        // Predicated region
        $region69: #{step.1} parent=59 // pred_check
          %p431 = pneg %p221
        $region70: #{step.1} parent=59 // pred_check_branch
          %433 = sbr.rel (%p431) target = $region72
        $region71: #{step.1} parent=59 // pred_region
          %p434 = scmp.lt.s32.totalorder %s21, 1
          %s435 = scalar_select %p434, %s21, 1
          %s436 = smul.addr %s435, 8
          %s437 = scalar_lea.vmem %s7, %s436
        $region72: #{step.1} parent=59 // pred_fallthru
          _
      $region60: #{step.1} parent=5 // pred_fallthru
        _
    $region6: #{step.1} parent=1 // loop_footer
      %s19 = sadd.s32 1, %s15
    $region7: #{step.1} parent=1 // loop_footer_branch
      %14 = sbr.rel target = $region3
    $region8: #{step.1} parent=1 // loop_exit
      _
    %438 = vsyncpa [#allocation3], 1
    %s439 = scalar_lea.sflag [#allocation3], 1
    %440 = vsyncpa %s439, 1

</llo_original>
